<compile_context>
chip_gen: v7x
topology: tpu7x:2x2x1
jax: 0.10.0
libtpu: 0.0.40
codegen_flags: <defaults>
</compile_context>

<pallas_src>
import functools
import math

import jax
import jax.numpy as jnp
from jax import lax
from jax.experimental import pallas as pl
from jax.experimental.pallas import tpu as pltpu

_LANES = 3 * 128           # 384: multiple of the 128-lane vreg width and of 3
_DEFAULT_TILE_ROWS = 2048  # 2048 * 384 * 4 B = 3 MiB per f32 input block


def _round_up(x: int, m: int) -> int:
    return (x + m - 1) // m * m


def _se2_partial_kernel(pred_ref, tgt_ref, out_ref, *, rg: float,
                        rows_in_last: int, needs_mask: bool):
    """Weighted sum of squared pose errors for one (tile_rows, 384) block."""
    d = pred_ref[...].astype(jnp.float32) - tgt_ref[...].astype(jnp.float32)
    sq = d * d

    if needs_mask:
        # Only the last block is ragged: rows past the true row count hold
        # undefined data; zero them out (static flag -> no cost otherwise).
        limit = jnp.where(pl.program_id(0) == pl.num_programs(0) - 1,
                          rows_in_last, sq.shape[0])
        row = lax.broadcasted_iota(jnp.int32, sq.shape, 0)
        sq = jnp.where(row < limit, sq, jnp.float32(0.0))

    # Row (sublane) reduce first: mostly VALU adds across vregs, one small
    # sublane tree per lane column; weights + lane reduce happen once per
    # block on a single (1, 384) slab.
    col = jnp.sum(sq, axis=0, keepdims=True)                     # (1, 384)
    lane = lax.broadcasted_iota(jnp.int32, col.shape, 1)
    w = jnp.where(lane % 3 == 2, jnp.float32(rg), jnp.float32(1.0))
    out_ref[0] = jnp.sum(col * w, axis=1, keepdims=True)         # (1, 1)


def se2_pose_loss(pose_pred, pose_target, *, block_width: float,
                  block_length: float, max_tile_rows: int = _DEFAULT_TILE_ROWS):
    """Pallas equivalent of SE2PoseLoss(block_width, block_length).forward."""
    assert pose_pred.shape == pose_target.shape
    assert pose_pred.ndim == 2 and pose_pred.shape[-1] == 3
    b = pose_pred.shape[0]
    rg = math.sqrt((block_width ** 2 + block_length ** 2) / 12.0)

    total = b * 3
    bulk_rows = total // _LANES      # full 384-wide rows (128 poses each)
    bulk_poses = bulk_rows * 128

    loss_sum = jnp.zeros((), jnp.float32)

    if bulk_rows > 0:
        itemsize = jnp.dtype(pose_pred.dtype).itemsize
        sub = max(8, 32 // itemsize)          # sublane multiple: f32 8, bf16 16

        # Balanced tiles derived from the grid (never a ~100%-padding last
        # block); forced to the (8/16, 128) divisibility, or the full extent.
        cap = max(sub, _round_up(min(max_tile_rows, bulk_rows), sub))
        num_blocks = pl.cdiv(bulk_rows, cap)
        tile_rows = _round_up(pl.cdiv(bulk_rows, num_blocks), sub)
        if tile_rows >= bulk_rows:
            tile_rows, num_blocks = bulk_rows, 1   # full-extent block is always legal
        else:
            num_blocks = pl.cdiv(bulk_rows, tile_rows)
        rows_in_last = bulk_rows - (num_blocks - 1) * tile_rows
        needs_mask = rows_in_last != tile_rows

        # Zero-copy lane-dense view when B % 128 == 0; otherwise a single
        # prefix slice of the bulk (the <128-pose tail is handled below).
        pred_bulk = pose_pred if bulk_poses == b else pose_pred[:bulk_poses]
        tgt_bulk = pose_target if bulk_poses == b else pose_target[:bulk_poses]
        pred2 = pred_bulk.reshape(bulk_rows, _LANES)
        tgt2 = tgt_bulk.reshape(bulk_rows, _LANES)

        kernel = functools.partial(_se2_partial_kernel, rg=rg,
                                   rows_in_last=rows_in_last,
                                   needs_mask=needs_mask)
        partials = pl.pallas_call(
            kernel,
            out_shape=jax.ShapeDtypeStruct((num_blocks, 1, 1), jnp.float32),
            grid=(num_blocks,),
            in_specs=[
                pl.BlockSpec((tile_rows, _LANES), lambda i: (i, 0)),
                pl.BlockSpec((tile_rows, _LANES), lambda i: (i, 0)),
            ],
            out_specs=pl.BlockSpec((1, 1, 1), lambda i: (i, 0, 0)),
            compiler_params=pltpu.CompilerParams(
                dimension_semantics=("parallel",),
                vmem_limit_bytes=32 * 1024 * 1024),
        )(pred2, tgt2)
        loss_sum = loss_sum + jnp.sum(partials)

    if bulk_poses < b:
        # Tail of fewer than 128 poses: negligible work, keep it in plain JAX
        # instead of padding (which would copy both full arrays).
        tp = pose_pred[bulk_poses:].astype(jnp.float32)
        tt = pose_target[bulk_poses:].astype(jnp.float32)
        dsq = (tp - tt) ** 2
        wts = jnp.array([1.0, 1.0, rg], jnp.float32)
        loss_sum = loss_sum + jnp.sum(dsq * wts)

    return loss_sum / jnp.float32(b)


def _reference_loss(pose_pred, pose_target, block_width, block_length):
    rg = math.sqrt((block_width ** 2 + block_length ** 2) / 12.0)
    p = pose_pred.astype(jnp.float32)
    t = pose_target.astype(jnp.float32)
    mse = lambda a, b: jnp.mean((a - b) ** 2)
    return (mse(p[:, 0], t[:, 0]) + mse(p[:, 1], t[:, 1])
            + rg * mse(p[:, 2], t[:, 2]))


if __name__ == "__main__":
    block_width, block_length = 0.1, 0.2
    key = jax.random.PRNGKey(0)
    k1, k2, k3, k4 = jax.random.split(key, 4)

    def check(pred, tgt, **kw):
        out = jax.block_until_ready(
            se2_pose_loss(pred, tgt, block_width=block_width,
                          block_length=block_length, **kw))
        ref = _reference_loss(pred, tgt, block_width, block_length)
        assert jnp.allclose(out, ref, rtol=1e-5, atol=1e-6), (out, ref)

    # B % 128 == 0: zero-copy lane-dense path, single full-extent block.
    check(jax.random.normal(k1, (256, 3), jnp.float32),
          jax.random.normal(k2, (256, 3), jnp.float32))

    # Multi-block grid with a ragged (masked) last block + a <128-pose tail.
    check(jax.random.normal(k3, (2500, 3), jnp.float32),
          jax.random.normal(k4, (2500, 3), jnp.float32),
          max_tile_rows=8)

    # Tiny batch (< 128 poses): pure-JAX tail path.
    check(jax.random.normal(k1, (8, 3), jnp.float32),
          jax.random.normal(k2, (8, 3), jnp.float32))

    # bf16 inputs stream at half the HBM bytes; kernel accumulates in f32.
    check(jax.random.normal(k3, (256, 3), jnp.float32).astype(jnp.bfloat16),
          jax.random.normal(k4, (256, 3), jnp.float32).astype(jnp.bfloat16))

    print("KERNEL_OK")
</pallas_src>

<mosaic_0001>
module attributes {stable_mosaic.version = 11 : i64} {
  func.func @_se2_partial_kernel(%arg0: i32, %arg1: memref<2x384xf32, #tpu.memory_space<vmem>>, %arg2: memref<2x384xf32, #tpu.memory_space<vmem>>, %arg3: memref<1x1x1xf32, #tpu.memory_space<vmem>>) attributes {dimension_semantics = [#tpu.dimension_semantics<parallel>], iteration_bounds = array<i64: 1>, scalar_prefetch = 0 : i64, scratch_operands = 0 : i64, tpu.core_type = #tpu.core_type<tc>, window_params = [{transform_indices = @transform_0, window_bounds = array<i64: 2, 384>}, {transform_indices = @transform_1, window_bounds = array<i64: 2, 384>}, {transform_indices = @transform_2, window_bounds = array<i64: 1, 1, 1>}]} {
    %c0 = arith.constant 0 : index
    %c0_0 = arith.constant 0 : index
    %0 = vector.load %arg1[%c0, %c0_0] : memref<2x384xf32, #tpu.memory_space<vmem>>, vector<2x384xf32>
    %c0_1 = arith.constant 0 : index
    %c0_2 = arith.constant 0 : index
    %1 = vector.load %arg2[%c0_1, %c0_2] : memref<2x384xf32, #tpu.memory_space<vmem>>, vector<2x384xf32>
    %2 = arith.subf %0, %1 : vector<2x384xf32>
    %3 = arith.mulf %2, %2 : vector<2x384xf32>
    %cst = arith.constant dense<0.000000e+00> : vector<384xf32>
    %4 = vector.multi_reduction <add>, %3, %cst [0] : vector<2x384xf32> to vector<384xf32>
    %5 = vector.shape_cast %4 : vector<384xf32> to vector<1x384xf32>
    %6 = tpu.iota {dimensions = array<i32: 1>} : vector<1x384xi32>
    %c3_i32 = arith.constant 3 : i32
    %c0_i32 = arith.constant 0 : i32
    %7 = arith.cmpi eq, %c3_i32, %c0_i32 : i32
    %c1_i32 = arith.constant 1 : i32
    %8 = arith.select %7, %c1_i32, %c3_i32 : i32
    %9 = vector.broadcast %8 : i32 to vector<1x384xi32>
    %10 = arith.remsi %6, %9 : vector<1x384xi32>
    %c0_i32_3 = arith.constant 0 : i32
    %11 = vector.broadcast %c0_i32_3 : i32 to vector<1x384xi32>
    %12 = arith.cmpi ne, %10, %11 : vector<1x384xi32>
    %c0_i32_4 = arith.constant 0 : i32
    %13 = vector.broadcast %c0_i32_4 : i32 to vector<1x384xi32>
    %14 = arith.cmpi slt, %10, %13 : vector<1x384xi32>
    %c0_i32_5 = arith.constant 0 : i32
    %15 = arith.cmpi slt, %8, %c0_i32_5 : i32
    %16 = vector.broadcast %15 : i1 to vector<1x384xi1>
    %17 = vector.broadcast %16 : vector<1x384xi1> to vector<1x384xi1>
    %18 = arith.xori %14, %17 : vector<1x384xi1>
    %19 = arith.andi %18, %12 : vector<1x384xi1>
    %20 = vector.broadcast %8 : i32 to vector<1x384xi32>
    %21 = arith.addi %10, %20 : vector<1x384xi32>
    %22 = arith.select %19, %21, %10 : vector<1x384xi1>, vector<1x384xi32>
    %c2_i32 = arith.constant 2 : i32
    %23 = vector.broadcast %c2_i32 : i32 to vector<1x384xi32>
    %24 = arith.cmpi eq, %22, %23 : vector<1x384xi32>
    %cst_6 = arith.constant 0.0645497218 : f32
    %cst_7 = arith.constant 1.000000e+00 : f32
    %25 = vector.broadcast %cst_6 : f32 to vector<1x384xf32>
    %26 = vector.broadcast %cst_7 : f32 to vector<1x384xf32>
    %27 = arith.select %24, %25, %26 : vector<1x384xi1>, vector<1x384xf32>
    %28 = arith.mulf %5, %27 : vector<1x384xf32>
    %cst_8 = arith.constant dense<0.000000e+00> : vector<1xf32>
    %29 = vector.multi_reduction <add>, %28, %cst_8 [1] : vector<1x384xf32> to vector<1xf32>
    %30 = vector.shape_cast %29 : vector<1xf32> to vector<1x1xf32>
    %c0_9 = arith.constant 0 : index
    %c0_10 = arith.constant 0 : index
    %c0_11 = arith.constant 0 : index
    %31 = vector.load %arg3[%c0_9, %c0_10, %c0_11] : memref<1x1x1xf32, #tpu.memory_space<vmem>>, vector<1x1x1xf32>
    %32 = vector.shape_cast %31 : vector<1x1x1xf32> to vector<1x1xf32>
    %33 = vector.shape_cast %30 : vector<1x1xf32> to vector<1x1x1xf32>
    tpu.vector_store %arg3[%c0_9, %c0_10, %c0_11], %33 {strides = array<i32>} : memref<1x1x1xf32, #tpu.memory_space<vmem>>, vector<1x1x1xf32>,
    return
  }
  func.func @transform_0(%arg0: i32) -> (i32, i32) {
    %c0_i32 = arith.constant 0 : i32
    %c0_i32_0 = arith.constant 0 : i32
    return %arg0, %c0_i32 : i32, i32
  }
  func.func @transform_1(%arg0: i32) -> (i32, i32) {
    %c0_i32 = arith.constant 0 : i32
    %c0_i32_0 = arith.constant 0 : i32
    return %arg0, %c0_i32 : i32, i32
  }
  func.func @transform_2(%arg0: i32) -> (i32, i32, i32) {
    %c0_i32 = arith.constant 0 : i32
    %c0_i32_0 = arith.constant 0 : i32
    %c0_i32_1 = arith.constant 0 : i32
    return %arg0, %c0_i32, %c0_i32_0 : i32, i32, i32
  }
}

</mosaic_0001>

<llo_original>
// kernel: tpu_custom_call.1
$region0: #{tpu_custom_call.1}
  #allocation0 [shape = 'u32[]', space=smem, size = 0x4, offset = 0x4, fixed_abs, tag = 'smem constant byte address 0x4 - core index']
  #allocation1 [shape = 'u32[144,128]{1,0:T(1,128)}', space=vmem, size = 0x12000, scoped, tag = 'internal scratch']
  %s0 = inlined_call_operand.hbm [shape: f32[2,384], index: 0, kind: input, shape index: {}]
  %s1 = inlined_call_operand.hbm [shape: f32[2,384], index: 1, kind: input, shape index: {}]
  %s2 = inlined_call_operand.hbm [shape: f32[1,1,1], index: 2, kind: output, shape index: {}]
  %s3 = sld [smem:[#allocation0]]
  $region26: #{tpu_custom_call.1} parent=0
    _
  %s5 = ssub.s32 1, %s3
  %s6 = scalar_select 0, %s5, %s3
  $region1: #{tpu_custom_call.1} parent=0
    #allocation2 [shape = 'u8[3072]{0}', space=vmem, size = 0xc00, scoped, tag = 'input window, operand 0, single buffered']
    #allocation3 [shape = 's32[1]{0}', space=sflag, size = 0x4, scoped, tag = 'scoped memory for tpu_custom_call.1']
    #allocation4 [shape = 's32[1]{0}', space=sflag, size = 0x4, scoped, tag = 'scoped memory for tpu_custom_call.1']
    #allocation5 [shape = 'u8[3072]{0}', space=vmem, size = 0xc00, scoped, tag = 'input window, operand 1, single buffered']
    #allocation6 [shape = 's32[1]{0}', space=sflag, size = 0x4, scoped, tag = 'scoped memory for tpu_custom_call.1']
    #allocation7 [shape = 'u8[512]{0}', space=vmem, size = 0x400, scoped, tag = 'output window, operand 0, single buffered']
    %7 = vsyncpa [#allocation3], 0
    %8 = vsyncpa [#allocation6], 0
    %9 = vsyncpa [#allocation4], 0
    // Predicated region
    $region2: #{tpu_custom_call.1} parent=1 // pred_check
      _
    $region3: #{tpu_custom_call.1} parent=1 // pred_check_branch
      %11 = sbr.rel (0) target = $region5
    $region4: #{tpu_custom_call.1} parent=1 // pred_region
      %s13 = ssub.s32 96, 96
      %14 = vsyncadd [#allocation3], %s13
      %s16 = sshll.u32 [#allocation2], 4
      %s17 = int_to_ptr.vmem [resolvable:$true] %s16
      %19 = dma.hbm_to_vmem [thread:$0]  %s0, 96, %s17, [#allocation3]
    $region5: #{tpu_custom_call.1} parent=1 // pred_fallthru
      _
    // Predicated region
    $region6: #{tpu_custom_call.1} parent=1 // pred_check
      _
    $region7: #{tpu_custom_call.1} parent=1 // pred_check_branch
      %21 = sbr.rel (0) target = $region9
    $region8: #{tpu_custom_call.1} parent=1 // pred_region
      %s23 = ssub.s32 96, 96
      %24 = vsyncadd [#allocation6], %s23
      %s26 = sshll.u32 [#allocation5], 4
      %s27 = int_to_ptr.vmem [resolvable:$true] %s26
      %29 = dma.hbm_to_vmem [thread:$0]  %s1, 96, %s27, [#allocation6]
    $region9: #{tpu_custom_call.1} parent=1 // pred_fallthru
      _
    // Predicated region
    $region10: #{tpu_custom_call.1} parent=1 // pred_check
      _
    $region11: #{tpu_custom_call.1} parent=1 // pred_check_branch
      %31 = sbr.rel (0) target = $region13
    $region12: #{tpu_custom_call.1} parent=1 // pred_region
      %32 = dma.done [#allocation3], 96
    $region13: #{tpu_custom_call.1} parent=1 // pred_fallthru
      _
    // Predicated region
    $region14: #{tpu_custom_call.1} parent=1 // pred_check
      _
    $region15: #{tpu_custom_call.1} parent=1 // pred_check_branch
      %34 = sbr.rel (0) target = $region17
    $region16: #{tpu_custom_call.1} parent=1 // pred_region
      %35 = dma.done [#allocation6], 96
    $region17: #{tpu_custom_call.1} parent=1 // pred_fallthru
      _
    %v36 = vld [vmem:[#allocation2] sm:$0x3f]
    %v37 = vld [vmem:[#allocation5] sm:$0x3f]
    %v38 = vsub.f32 %v36, %v37
    %v39 = vmul.f32 %v38, %v38
    %v41 = vcombine.high %v39, %v39
    %v43 = vunpack.c.l.s4 1983009808
    %v44 = vunpack.c.0.s8 %v43
    %v45 = vlaneseq
    %v46 = vshrl.u32 %v45, 7
    %v47 = vsub.s32 %v44, %v46
    %v48 = vrot.slane %v39, %v47
    %v50 = vunpack.c.l.s4 1983009808
    %v51 = vunpack.c.0.s8 %v50
    %v52 = vlaneseq
    %v53 = vshrl.u32 %v52, 7
    %v54 = vsub.s32 %v51, %v53
    %v55 = vrot.slane %v41, %v54
    %v56 = vcombine.high %v48, %v48
    %vm60 = vcmask 1041408
    %v61 = vsel %vm60, %v48, 0.0
    %v62 = vrot.slane %v61, 4
    %v63 = vadd.f32 %v61, %v62
    %v64 = vrot.slane %v63, 2
    %v65 = vadd.f32 %v63, %v64
    %v66 = vrot.slane %v65, 1
    %v67 = vadd.f32 %v65, %v66
    %v68 = vsel %vm60, %v56, 0.0
    %v69 = vrot.slane %v68, 4
    %v70 = vadd.f32 %v68, %v69
    %v71 = vrot.slane %v70, 2
    %v72 = vadd.f32 %v70, %v71
    %v73 = vrot.slane %v72, 1
    %v74 = vadd.f32 %v72, %v73
    %v75 = vsel %vm60, %v55, 0.0
    %v76 = vrot.slane %v75, 4
    %v77 = vadd.f32 %v75, %v76
    %v78 = vrot.slane %v77, 2
    %v79 = vadd.f32 %v77, %v78
    %v80 = vrot.slane %v79, 1
    %v81 = vadd.f32 %v79, %v80
    %v82 = vlaneseq
    %v83 = vand.u32 %v82, 127
    %v84 = vadd.s32 %v83, 128
    %v85 = vadd.s32 %v83, 256
    %vm86 = vcmp.lt.s32.totalorder %v83, 0
    %v87 = vsub.s32 0, %v83
    %v88 = vsel %vm86, %v87, %v83
    %v89 = vmul.u32.u64.compose %v88, 2863311531
    %v90 = vextract.low.u32 %v89
    %v91 = vextract.high.u32 %v89
    %v92 = vshrl.u32 %v91, 1
    %v93 = vmul.u32 %v92, 3
    %v94 = vsub.s32 %v88, %v93
    %v95 = vsub.s32 0, %v94
    %v96 = vsel %vm86, %v95, %v94
    %vm97 = vcmp.lt.s32.totalorder %v84, 0
    %v98 = vsub.s32 0, %v84
    %v99 = vsel %vm97, %v98, %v84
    %v100 = vmul.u32.u64.compose %v99, 2863311531
    %v101 = vextract.low.u32 %v100
    %v102 = vextract.high.u32 %v100
    %v103 = vshrl.u32 %v102, 1
    %v104 = vmul.u32 %v103, 3
    %v105 = vsub.s32 %v99, %v104
    %v106 = vsub.s32 0, %v105
    %v107 = vsel %vm97, %v106, %v105
    %vm108 = vcmp.lt.s32.totalorder %v85, 0
    %v109 = vsub.s32 0, %v85
    %v110 = vsel %vm108, %v109, %v85
    %v111 = vmul.u32.u64.compose %v110, 2863311531
    %v112 = vextract.low.u32 %v111
    %v113 = vextract.high.u32 %v111
    %v114 = vshrl.u32 %v113, 1
    %v115 = vmul.u32 %v114, 3
    %v116 = vsub.s32 %v110, %v115
    %v117 = vsub.s32 0, %v116
    %v118 = vsel %vm108, %v117, %v116
    %vm119 = vcmp.ne.s32.totalorder %v96, 0
    %vm120 = vcmp.ne.s32.totalorder %v107, 0
    %vm121 = vcmp.ne.s32.totalorder %v118, 0
    %vm122 = vcmp.lt.s32.totalorder %v96, 0
    %vm123 = vcmp.lt.s32.totalorder %v107, 0
    %vm124 = vcmp.lt.s32.totalorder %v118, 0
    %vm125 = vmand %vm122, %vm119
    %vm126 = vmand %vm123, %vm120
    %vm127 = vmand %vm124, %vm121
    %v128 = vadd.s32 %v96, 3
    %v129 = vadd.s32 %v107, 3
    %v130 = vadd.s32 %v118, 3
    %v131 = vsel %vm125, %v128, %v96
    %v132 = vsel %vm126, %v129, %v107
    %v133 = vsel %vm127, %v130, %v118
    %vm134 = vcmp.eq.s32.totalorder %v131, 2
    %vm135 = vcmp.eq.s32.totalorder %v132, 2
    %vm136 = vcmp.eq.s32.totalorder %v133, 2
    %v137 = vsel %vm134, 0.06454972, 1.0
    %v138 = vsel %vm135, 0.06454972, 1.0
    %v139 = vsel %vm136, 0.06454972, 1.0
    %v140 = vmul.f32 %v67, %v137
    %v141 = vmul.f32 %v74, %v138
    %v142 = vmul.f32 %v81, %v139
    %v143 = vadd.f32 %v140, %v141
    %v144 = vadd.f32 %v143, %v142
    %145 = vadd.xlane.f32.xlu0 %v144
    %v146 = vpop.xlane.xlu0 %145
    %vm147 = vcmask 0
    %148 = vst.msk [vmem:[#allocation7] sm:$0x1] %vm147, %v146
    // Predicated region
    $region18: #{tpu_custom_call.1} parent=1 // pred_check
      _
    $region19: #{tpu_custom_call.1} parent=1 // pred_check_branch
      %150 = sbr.rel (0) target = $region21
    $region20: #{tpu_custom_call.1} parent=1 // pred_region
      %s152 = ssub.s32 16, 16
      %153 = vsyncadd [#allocation4], %s152
      %s155 = sshll.u32 [#allocation7], 4
      %s156 = int_to_ptr.vmem [resolvable:$true] %s155
      %158 = dma.vmem_to_hbm [thread:$0]  %s156, 16, %s2, [#allocation4]
    $region21: #{tpu_custom_call.1} parent=1 // pred_fallthru
      _
    // Predicated region
    $region22: #{tpu_custom_call.1} parent=1 // pred_check
      _
    $region23: #{tpu_custom_call.1} parent=1 // pred_check_branch
      %160 = sbr.rel (0) target = $region25
    $region24: #{tpu_custom_call.1} parent=1 // pred_region
      %161 = dma.done [#allocation4], 16
    $region25: #{tpu_custom_call.1} parent=1 // pred_fallthru
      _
    %162 = vsyncpa [#allocation3], 1
    %163 = vsyncpa [#allocation6], 1
    %164 = vsyncpa [#allocation4], 1

</llo_original>
